<compile_context>
chip_gen: v7x
topology: tpu7x:2x2x1
jax: 0.10.0
libtpu: 0.0.40
codegen_flags: <defaults>
</compile_context>

<pallas_src>
import jax
import jax.numpy as jnp
from jax.experimental import pallas as pl
from jax.experimental.pallas import tpu as pltpu


def _aggregator_meanmax_kernel(x_ref, bias_ref, w1_ref, w2_ref, out_ref):
    # x_ref:    (BB, S, D)   bf16   activations for BB batch elements
    # bias_ref: (BB, S)      f32    additive mask bias = -10000 * (1 - mask)
    # w1_ref:   (D, H)       bf16   resident (Buffered(1))
    # w2_ref:   (H, NH)      bf16   resident (Buffered(1))
    # out_ref:  (BB, 2*D)    f32    [:, :D] = max over heads, [:, D:] = mean over heads
    BB, S, D = x_ref.shape
    NH = w2_ref.shape[1]

    x_bf = x_ref[...]                                 # (BB, S, D) bf16

    # Collapse the batch block into the MXU M dimension: one (BB*S, D) @ (D, H) pass.
    # Note: this reshape (and the one below) is copy-free only when S is a multiple
    # of the sublane pack; for other S Mosaic inserts a small in-VMEM copy.
    x2 = x_bf.reshape(BB * S, D)
    h = jnp.dot(x2, w1_ref[...], preferred_element_type=jnp.float32)   # (BB*S, H) f32
    h_bf = jnp.tanh(h.astype(jnp.bfloat16))                            # bf16 tanh (EUP)
    logits = jnp.dot(h_bf, w2_ref[...],
                     preferred_element_type=jnp.float32)               # (BB*S, NH) f32

    # Lane-dense softmax layout: put the sequence axis on lanes -> (BB, NH, S).
    logits_t = jnp.transpose(logits.reshape(BB, S, NH), (0, 2, 1))     # (BB, NH, S)
    logits_t = logits_t + bias_ref[...][:, None, :]                    # lane-aligned add

    # Softmax over the sequence axis (now the last axis), f32 math.
    m = jnp.max(logits_t, axis=-1, keepdims=True)                      # (BB, NH, 1)
    e = jnp.exp(logits_t - m)                                          # (BB, NH, S)
    denom = jnp.sum(e, axis=-1, keepdims=True)                         # (BB, NH, 1)
    attn = e * pl.reciprocal(denom, approx=True)                       # (BB, NH, S)

    # aggregation[b, n, d] = sum_s attn[b, n, s] * x[b, s, d]  -> (BB, NH, D)
    agg = jnp.einsum(
        "bns,bsd->bnd",
        attn.astype(jnp.bfloat16),
        x_bf,
        preferred_element_type=jnp.float32,
    )

    # Static-slice stores into the lane-dense (BB, 2*D) output block.
    out_ref[:, :D] = jnp.max(agg, axis=1)                  # max over heads
    out_ref[:, D:] = jnp.sum(agg, axis=1) * (1.0 / NH)     # mean over heads


def _vmem_bytes_per_step(BB, S, D, H, NH):
    """Rough per-grid-step VMEM footprint: pipelined blocks + major intermediates."""
    x_blk = 2 * BB * S * D * 2            # bf16 x block, double-buffered
    bias_blk = 2 * BB * S * 4             # f32 bias block, double-buffered
    out_blk = 2 * BB * 2 * D * 4          # f32 output block, double-buffered
    weights = D * H * 2 + H * NH * 2      # bf16 weights, Buffered(1)
    inter = (BB * S * H * (4 + 2)         # h (f32) + tanh(h) (bf16)
             + BB * S * NH * 4            # logits (f32)
             + 3 * BB * NH * S * 4        # logits_t / e / attn (f32)
             + BB * NH * S * 2            # attn (bf16)
             + BB * NH * D * 4)           # agg (f32)
    return x_blk + bias_blk + out_blk + weights + inter


def _vmem_budget_bytes():
    """~75% of this chip's physical VMEM (≈48 MiB on v7x, ≈96 MiB on v5e/v6e)."""
    cap = 64 << 20
    try:
        info = pltpu.get_tpu_info()
        cap = int(getattr(info, "vmem_capacity_bytes", cap) or cap)
    except Exception:
        pass
    return (cap * 3) // 4


def _pick_block_b(B, S, D, H, NH, budget, target_m=1024):
    """Pick batch block BB such that: BB divides B; BB == B or BB % 8 == 0 (block-shape
    legality for the (BB, S) bias and (BB, 2D) output blocks); the collapsed MXU M dim
    (BB*S) stays near target_m; the per-step VMEM fits the budget; and, where possible,
    B//BB >= 2 so the 'parallel' batch axis can shard across v7x's two TensorCores."""
    candidates = [d for d in range(1, B + 1)
                  if B % d == 0 and (d == B or d % 8 == 0)]
    multi = [d for d in candidates if B // d >= 2]
    pool = multi if multi else candidates
    fits = [d for d in pool if _vmem_bytes_per_step(d, S, D, H, NH) <= budget]
    pool = fits if fits else [min(pool)]
    near = [d for d in pool if d * S <= target_m]
    return max(near) if near else min(pool)


def aggregator_meanmax(hidden_states, attention_mask, w1, w2, *, block_b=None):
    """hidden_states: (B, S, D); attention_mask: (B, S); w1: (D, H); w2: (H, NH).
    Weights are stored pre-transposed as (in, out), i.e. x @ W == PyTorch x @ W.T.
    Returns (B, 2*D) f32 = concat([max over heads, mean over heads], axis=-1)."""
    B, S, D = hidden_states.shape
    H = w1.shape[1]
    NH = w2.shape[1]

    # Pad awkward batch sizes up to a multiple of 8 so a sublane-aligned batch block
    # (BB % 8 == 0) with >= 2 grid steps exists; padded rows are dropped at the end.
    b_orig = B
    pad = (-B) % 8 if (block_b is None and B > 8 and B % 8 != 0) else 0
    if pad:
        hidden_states = jnp.pad(hidden_states, ((0, pad), (0, 0), (0, 0)))
        attention_mask = jnp.pad(attention_mask, ((0, pad), (0, 0)))
        B += pad

    budget = int(_vmem_budget_bytes())
    BB = _pick_block_b(B, S, D, H, NH, budget) if block_b is None else block_b
    assert B % BB == 0, "batch block must divide the (padded) batch size"

    # bf16 x: dominant HBM stream and both of its MXU uses want bf16 anyway.
    x_bf = hidden_states.astype(jnp.bfloat16)
    # Lane-dense additive bias (no lane-sparse (B, S, 1) blocks).
    bias = (attention_mask.astype(jnp.float32) - 1.0) * 10000.0        # (B, S)
    w1_bf = w1.astype(jnp.bfloat16)
    w2_bf = w2.astype(jnp.bfloat16)

    out = pl.pallas_call(
        _aggregator_meanmax_kernel,
        out_shape=jax.ShapeDtypeStruct((B, 2 * D), jnp.float32),
        grid_spec=pltpu.PrefetchScalarGridSpec(
            num_scalar_prefetch=0,
            grid=(B // BB,),
            in_specs=[
                pl.BlockSpec((BB, S, D), lambda b: (b, 0, 0)),
                pl.BlockSpec((BB, S), lambda b: (b, 0)),
                pl.BlockSpec((D, H), lambda b: (0, 0),
                             pipeline_mode=pl.Buffered(1)),
                pl.BlockSpec((H, NH), lambda b: (0, 0),
                             pipeline_mode=pl.Buffered(1)),
            ],
            out_specs=pl.BlockSpec((BB, 2 * D), lambda b: (b, 0)),
        ),
        compiler_params=pltpu.CompilerParams(
            dimension_semantics=("parallel",),
            vmem_limit_bytes=budget,
        ),
    )(x_bf, bias, w1_bf, w2_bf)

    return out[:b_orig] if pad else out


def _reference(hidden_states, attention_mask, w1, w2):
    """Pure-JAX (f32) reference mirroring the PyTorch module."""
    logits = jnp.tanh(hidden_states @ w1) @ w2                         # (B, S, NH)
    mask = attention_mask.astype(jnp.float32)[:, :, None]              # (B, S, 1)
    logits = logits - 10000.0 * (1.0 - mask)
    attn = jax.nn.softmax(logits, axis=1)                              # (B, S, NH)
    attn = jnp.transpose(attn, (0, 2, 1))                              # (B, NH, S)
    agg = jnp.einsum("bns,bsd->bnd", attn, hidden_states)              # (B, NH, D)
    return jnp.concatenate([jnp.max(agg, axis=1), jnp.mean(agg, axis=1)], axis=-1)


if __name__ == "__main__":
    # Small shapes consistent with the module: batch=2, seq=8, input_size=32,
    # hidden_size=64, num_heads=16.
    B, S, D, H, NH = 2, 8, 32, 64, 16

    key = jax.random.PRNGKey(0)
    kx, km, k1, k2 = jax.random.split(key, 4)

    hidden_states = jax.random.normal(kx, (B, S, D), dtype=jnp.float32)
    attention_mask = (jax.random.uniform(km, (B, S)) > 0.3).astype(jnp.float32)
    attention_mask = attention_mask.at[:, 0].set(1.0)  # at least one valid position per row

    # Deterministic "weights" (Linear layers have no bias in the module).
    w1 = 0.1 * jax.random.normal(k1, (D, H), dtype=jnp.float32)   # Linear(D -> H)
    w2 = 0.1 * jax.random.normal(k2, (H, NH), dtype=jnp.float32)  # Linear(H -> NH)

    out = aggregator_meanmax(hidden_states, attention_mask, w1, w2)
    out = jax.block_until_ready(out)

    ref = _reference(hidden_states, attention_mask, w1, w2)
    assert out.shape == (B, 2 * D)
    # Kernel streams x and runs all three matmuls (and tanh) in bf16 with f32
    # accumulation, and uses an approx reciprocal for the softmax denominator;
    # the reference is pure f32, hence the relaxed tolerance.
    assert jnp.allclose(out, ref, rtol=3e-2, atol=3e-2), "mismatch vs reference"

    print("KERNEL_OK")
</pallas_src>

<mosaic_0001>
module attributes {stable_mosaic.version = 11 : i64} {
  func.func @_aggregator_meanmax_kernel(%arg0: i32, %arg1: memref<2x8x32xbf16, #tpu.memory_space<vmem>>, %arg2: memref<2x8xf32, #tpu.memory_space<vmem>>, %arg3: memref<32x64xbf16, #tpu.memory_space<vmem>>, %arg4: memref<64x16xbf16, #tpu.memory_space<vmem>>, %arg5: memref<2x64xf32, #tpu.memory_space<vmem>>) attributes {dimension_semantics = [#tpu.dimension_semantics<parallel>], iteration_bounds = array<i64: 1>, scalar_prefetch = 0 : i64, scratch_operands = 0 : i64, tpu.core_type = #tpu.core_type<tc>, window_params = [{transform_indices = @transform_0, window_bounds = array<i64: 2, 8, 32>}, {transform_indices = @transform_1, window_bounds = array<i64: 2, 8>}, {pipeline_mode = #tpu.pipeline_mode<synchronous>, transform_indices = @transform_2, window_bounds = array<i64: 32, 64>}, {pipeline_mode = #tpu.pipeline_mode<synchronous>, transform_indices = @transform_3, window_bounds = array<i64: 64, 16>}, {transform_indices = @transform_4, window_bounds = array<i64: 2, 64>}]} {
    %c0 = arith.constant 0 : index
    %c0_0 = arith.constant 0 : index
    %c0_1 = arith.constant 0 : index
    %0 = vector.load %arg1[%c0, %c0_0, %c0_1] : memref<2x8x32xbf16, #tpu.memory_space<vmem>>, vector<2x8x32xbf16>
    %1 = vector.shape_cast %0 : vector<2x8x32xbf16> to vector<16x32xbf16>
    %c0_2 = arith.constant 0 : index
    %c0_3 = arith.constant 0 : index
    %2 = vector.load %arg3[%c0_2, %c0_3] : memref<32x64xbf16, #tpu.memory_space<vmem>>, vector<32x64xbf16>
    %cst = arith.constant dense<0.000000e+00> : vector<16x64xf32>
    %3 = tpu.matmul %1, %2, %cst {dimension_numbers = #tpu.dot_dimension_numbers<[1], [0], [0], [1], [0, 0, 1, 1], [], []>} : vector<16x32xbf16>, vector<32x64xbf16>, vector<16x64xf32> -> vector<16x64xf32>
    %4 = arith.truncf %3 : vector<16x64xf32> to vector<16x64xbf16>
    %5 = math.tanh %4 : vector<16x64xbf16>
    %c0_4 = arith.constant 0 : index
    %c0_5 = arith.constant 0 : index
    %6 = vector.load %arg4[%c0_4, %c0_5] : memref<64x16xbf16, #tpu.memory_space<vmem>>, vector<64x16xbf16>
    %cst_6 = arith.constant dense<0.000000e+00> : vector<16x16xf32>
    %7 = tpu.matmul %5, %6, %cst_6 {dimension_numbers = #tpu.dot_dimension_numbers<[1], [0], [0], [1], [0, 0, 1, 1], [], []>} : vector<16x64xbf16>, vector<64x16xbf16>, vector<16x16xf32> -> vector<16x16xf32>
    %8 = vector.shape_cast %7 : vector<16x16xf32> to vector<2x8x16xf32>
    %9 = tpu.transpose %8, [0, 2, 1] : vector<2x8x16xf32> -> vector<2x16x8xf32>
    %c0_7 = arith.constant 0 : index
    %c0_8 = arith.constant 0 : index
    %10 = vector.load %arg2[%c0_7, %c0_8] : memref<2x8xf32, #tpu.memory_space<vmem>>, vector<2x8xf32>
    %11 = vector.shape_cast %10 : vector<2x8xf32> to vector<2x1x8xf32>
    %12 = vector.broadcast %11 : vector<2x1x8xf32> to vector<2x16x8xf32>
    %13 = arith.addf %9, %12 : vector<2x16x8xf32>
    %cst_9 = arith.constant dense<0xFF800000> : vector<2x16xf32>
    %14 = vector.multi_reduction <maximumf>, %13, %cst_9 [2] : vector<2x16x8xf32> to vector<2x16xf32>
    %15 = vector.shape_cast %14 : vector<2x16xf32> to vector<2x16x1xf32>
    %16 = vector.broadcast %15 : vector<2x16x1xf32> to vector<2x16x8xf32>
    %17 = arith.subf %13, %16 : vector<2x16x8xf32>
    %18 = math.exp %17 : vector<2x16x8xf32>
    %cst_10 = arith.constant dense<0.000000e+00> : vector<2x16xf32>
    %19 = vector.multi_reduction <add>, %18, %cst_10 [2] : vector<2x16x8xf32> to vector<2x16xf32>
    %20 = vector.shape_cast %19 : vector<2x16xf32> to vector<2x16x1xf32>
    %21 = tpu.reciprocal %20 {approx = true} : vector<2x16x1xf32> -> vector<2x16x1xf32>
    %22 = vector.broadcast %21 : vector<2x16x1xf32> to vector<2x16x8xf32>
    %23 = arith.mulf %18, %22 : vector<2x16x8xf32>
    %24 = arith.truncf %23 : vector<2x16x8xf32> to vector<2x16x8xbf16>
    "tpu.trace_start"() <{level = 10 : i32, message = "bns,bsd->bnd"}> : () -> ()
    %cst_11 = arith.constant dense<0.000000e+00> : vector<2x16x32xf32>
    %25 = tpu.matmul %24, %0, %cst_11 {dimension_numbers = #tpu.dot_dimension_numbers<[2], [1], [1], [2], [0, 0, 0, 1, 1, 2], [0], [0]>} : vector<2x16x8xbf16>, vector<2x8x32xbf16>, vector<2x16x32xf32> -> vector<2x16x32xf32>
    "tpu.trace_stop"() : () -> ()
    %cst_12 = arith.constant dense<0xFF800000> : vector<2x32xf32>
    %26 = vector.multi_reduction <maximumf>, %25, %cst_12 [1] : vector<2x16x32xf32> to vector<2x32xf32>
    %c0_13 = arith.constant 0 : index
    %c0_14 = arith.constant 0 : index
    %27 = vector.load %arg5[%c0_13, %c0_14] : memref<2x64xf32, #tpu.memory_space<vmem>>, vector<2x32xf32>
    tpu.vector_store %arg5[%c0_13, %c0_14], %26 {strides = array<i32>} : memref<2x64xf32, #tpu.memory_space<vmem>>, vector<2x32xf32>,
    %cst_15 = arith.constant dense<0.000000e+00> : vector<2x32xf32>
    %28 = vector.multi_reduction <add>, %25, %cst_15 [1] : vector<2x16x32xf32> to vector<2x32xf32>
    %cst_16 = arith.constant 6.250000e-02 : f32
    %29 = vector.broadcast %cst_16 : f32 to vector<2x32xf32>
    %30 = arith.mulf %28, %29 : vector<2x32xf32>
    %c0_17 = arith.constant 0 : index
    %c32 = arith.constant 32 : index
    %31 = vector.load %arg5[%c0_17, %c32] : memref<2x64xf32, #tpu.memory_space<vmem>>, vector<2x32xf32>
    tpu.vector_store %arg5[%c0_17, %c32], %30 {strides = array<i32>} : memref<2x64xf32, #tpu.memory_space<vmem>>, vector<2x32xf32>,
    return
  }
  func.func @transform_0(%arg0: i32) -> (i32, i32, i32) {
    %c0_i32 = arith.constant 0 : i32
    %c0_i32_0 = arith.constant 0 : i32
    %c0_i32_1 = arith.constant 0 : i32
    return %arg0, %c0_i32, %c0_i32_0 : i32, i32, i32
  }
  func.func @transform_1(%arg0: i32) -> (i32, i32) {
    %c0_i32 = arith.constant 0 : i32
    %c0_i32_0 = arith.constant 0 : i32
    return %arg0, %c0_i32 : i32, i32
  }
  func.func @transform_2(%arg0: i32) -> (i32, i32) {
    %c0_i32 = arith.constant 0 : i32
    %c0_i32_0 = arith.constant 0 : i32
    %c0_i32_1 = arith.constant 0 : i32
    return %c0_i32, %c0_i32_0 : i32, i32
  }
  func.func @transform_3(%arg0: i32) -> (i32, i32) {
    %c0_i32 = arith.constant 0 : i32
    %c0_i32_0 = arith.constant 0 : i32
    %c0_i32_1 = arith.constant 0 : i32
    return %c0_i32, %c0_i32_0 : i32, i32
  }
  func.func @transform_4(%arg0: i32) -> (i32, i32) {
    %c0_i32 = arith.constant 0 : i32
    %c0_i32_0 = arith.constant 0 : i32
    return %arg0, %c0_i32 : i32, i32
  }
}

</mosaic_0001>

<llo_original>
// kernel: tpu_custom_call.1
$region0: #{tpu_custom_call.1}
  #allocation0 [shape = 'u32[]', space=smem, size = 0x4, offset = 0x4, fixed_abs, tag = 'smem constant byte address 0x4 - core index']
  #allocation1 [shape = 'u32[144,128]{1,0:T(1,128)}', space=vmem, size = 0x12000, scoped, tag = 'internal scratch']
  %s0 = inlined_call_operand.vmem [shape: bf16[2,8,32], index: 0, kind: input, shape index: {}]
  %s1 = inlined_call_operand.vmem [shape: f32[2,8], index: 1, kind: input, shape index: {}]
  %s2 = inlined_call_operand.vmem [shape: bf16[32,64], index: 2, kind: input, shape index: {}]
  %s3 = inlined_call_operand.vmem [shape: bf16[64,16], index: 3, kind: input, shape index: {}]
  %s4 = inlined_call_operand.hbm [shape: f32[2,64], index: 4, kind: output, shape index: {}]
  %s5 = sld [smem:[#allocation0]]
  $region26: #{tpu_custom_call.1} parent=0
    _
  %s7 = ssub.s32 1, %s5
  %s8 = scalar_select 0, %s7, %s5
  $region1: #{tpu_custom_call.1} parent=0
    #allocation2 [shape = 'u8[1024]{0}', space=vmem, size = 0x400, scoped, tag = 'output window, operand 0, single buffered']
    #allocation3 [shape = 's32[1]{0}', space=sflag, size = 0x4, scoped, tag = 'scoped memory for tpu_custom_call.1']
    %9 = vsyncpa [#allocation3], 0
    // Predicated region
    $region2: #{tpu_custom_call.1} parent=1 // pred_check
      _
    $region3: #{tpu_custom_call.1} parent=1 // pred_check_branch
      %11 = sbr.rel (0) target = $region5
    $region4: #{tpu_custom_call.1} parent=1 // pred_region
      _
    $region5: #{tpu_custom_call.1} parent=1 // pred_fallthru
      _
    // Predicated region
    $region6: #{tpu_custom_call.1} parent=1 // pred_check
      _
    $region7: #{tpu_custom_call.1} parent=1 // pred_check_branch
      %13 = sbr.rel (0) target = $region9
    $region8: #{tpu_custom_call.1} parent=1 // pred_region
      _
    $region9: #{tpu_custom_call.1} parent=1 // pred_fallthru
      _
    // Predicated region
    $region10: #{tpu_custom_call.1} parent=1 // pred_check
      _
    $region11: #{tpu_custom_call.1} parent=1 // pred_check_branch
      %15 = sbr.rel (0) target = $region13
    $region12: #{tpu_custom_call.1} parent=1 // pred_region
      _
    $region13: #{tpu_custom_call.1} parent=1 // pred_fallthru
      _
    // Predicated region
    $region14: #{tpu_custom_call.1} parent=1 // pred_check
      _
    $region15: #{tpu_custom_call.1} parent=1 // pred_check_branch
      %17 = sbr.rel (0) target = $region17
    $region16: #{tpu_custom_call.1} parent=1 // pred_region
      _
    $region17: #{tpu_custom_call.1} parent=1 // pred_fallthru
      _
    %v19 = vld [vmem:[%s0] sm:$0xf]
    %v20 = vld [vmem:[%s0 + $0x4] sm:$0xf]
    %v21 = vld [vmem:[%s2] sm:$0xf]
    %v22 = vld [vmem:[%s2 + $0x4] sm:$0xf]
    %v23 = vld [vmem:[%s2 + $0x8] sm:$0xf]
    %v24 = vld [vmem:[%s2 + $0xc] sm:$0xf]
    %v27 = vunpack.c.l.b16 %v19
    %v28 = vunpack.c.l.b16 %v20
    %v29 = vpack.c.b16 %v28, %v27
    %v34 = vunpack.c.l.b16 %v21
    %v35 = vunpack.c.l.b16 %v22
    %v36 = vunpack.c.l.b16 %v23
    %v37 = vunpack.c.l.b16 %v24
    %v38 = vpack.c.b16 %v35, %v34
    %v39 = vpack.c.b16 %v37, %v36
    %vm42 = vcmask 261120
    %v44 = vsel %vm42, %v29, 0
    %46 = vmatprep.subr.bf16.mxu0 0
    %47 = vmatpush1.bf16.msra.mxu0 %v38
    %48 = vmatprep.subr.bf16.mxu0 0
    %49 = vmatpush1.bf16.msra.mxu0 %v39
    %50 = vmatprep.subr.bf16.mxu0 0
    %51 = vmatpush1.bf16.msra.mxu0 0
    %52 = vmatprep.subr.bf16.mxu0 0
    %53 = vmatpush1.bf16.msra.mxu0 0
    %54 = vmatprep.subr.bf16.mxu0 0
    %55 = vmatpush1.bf16.msra.mxu0 0
    %56 = vmatprep.subr.bf16.mxu0 0
    %57 = vmatpush1.bf16.msra.mxu0 0
    %58 = vmatprep.subr.bf16.mxu0 0
    %59 = vmatpush1.bf16.msra.mxu0 0
    %60 = vmatprep.subr.bf16.mxu0 0
    %61 = vmatpush1.bf16.msra.mxu0 0
    %62 = vmatprep.subr.bf16.mxu0 0
    %63 = vmatpush1.bf16.msra.mxu0 0
    %64 = vmatprep.subr.bf16.mxu0 0
    %65 = vmatpush1.bf16.msra.mxu0 0
    %66 = vmatprep.subr.bf16.mxu0 0
    %67 = vmatpush1.bf16.msra.mxu0 0
    %68 = vmatprep.subr.bf16.mxu0 0
    %69 = vmatpush1.bf16.msra.mxu0 0
    %70 = vmatprep.subr.bf16.mxu0 0
    %71 = vmatpush1.bf16.msra.mxu0 0
    %72 = vmatprep.subr.bf16.mxu0 0
    %73 = vmatpush1.bf16.msra.mxu0 0
    %74 = vmatprep.subr.bf16.mxu0 0
    %75 = vmatpush1.bf16.msra.mxu0 0
    %76 = vmatprep.subr.bf16.mxu0 0
    %77 = vmatpush1.bf16.msra.mxu0 0
    %78 = vmatprep.mubr.bf16.mxu0 0
    %79 = vmatmul.mubr.bf16.gmra.mrb[0].mxu0 %v44
    %v80 = vpop.f32.mrb[0].mxu0
    %v81 = vadd.f32 0.0, %v80
    %v82 = vpop.f32.mrb[0].mxu0
    %v83 = vpop.f32.mrb[0].mxu0
    %v84 = vadd.f32 0.0, %v83
    %v85 = vpop.f32.mrb[0].mxu0
    %86 = vdwg.mxu0
    %v87 = vpack.c.bf16 %v84, %v81
    %v88 = vtanh.bf16.pop %v87
    %v89 = vld [vmem:[%s3] sm:$0xf]
    %v90 = vld [vmem:[%s3 + $0x4] sm:$0xf]
    %v91 = vld [vmem:[%s3 + $0x8] sm:$0xf]
    %v92 = vld [vmem:[%s3 + $0xc] sm:$0xf]
    %v93 = vld [vmem:[%s3 + $0x10] sm:$0xf]
    %v94 = vld [vmem:[%s3 + $0x14] sm:$0xf]
    %v95 = vld [vmem:[%s3 + $0x18] sm:$0xf]
    %v96 = vld [vmem:[%s3 + $0x1c] sm:$0xf]
    %v105 = vunpack.c.l.b16 %v89
    %v106 = vunpack.c.l.b16 %v90
    %v107 = vunpack.c.l.b16 %v91
    %v108 = vunpack.c.l.b16 %v92
    %v109 = vunpack.c.l.b16 %v93
    %v110 = vunpack.c.l.b16 %v94
    %v111 = vunpack.c.l.b16 %v95
    %v112 = vunpack.c.l.b16 %v96
    %v113 = vpack.c.b16 %v106, %v105
    %v114 = vpack.c.b16 %v108, %v107
    %v115 = vpack.c.b16 %v110, %v109
    %v116 = vpack.c.b16 %v112, %v111
    %vm121 = vcmask 523264
    %v123 = vsel %vm121, %v88, 0
    %125 = vmatprep.subr.bf16.mxu0 0
    %126 = vmatpush1.bf16.msra.mxu0 %v113
    %127 = vmatprep.subr.bf16.mxu0 0
    %128 = vmatpush1.bf16.msra.mxu0 %v114
    %129 = vmatprep.subr.bf16.mxu0 0
    %130 = vmatpush1.bf16.msra.mxu0 %v115
    %131 = vmatprep.subr.bf16.mxu0 0
    %132 = vmatpush1.bf16.msra.mxu0 %v116
    %133 = vmatprep.subr.bf16.mxu0 0
    %134 = vmatpush1.bf16.msra.mxu0 0
    %135 = vmatprep.subr.bf16.mxu0 0
    %136 = vmatpush1.bf16.msra.mxu0 0
    %137 = vmatprep.subr.bf16.mxu0 0
    %138 = vmatpush1.bf16.msra.mxu0 0
    %139 = vmatprep.subr.bf16.mxu0 0
    %140 = vmatpush1.bf16.msra.mxu0 0
    %141 = vmatprep.subr.bf16.mxu0 0
    %142 = vmatpush1.bf16.msra.mxu0 0
    %143 = vmatprep.subr.bf16.mxu0 0
    %144 = vmatpush1.bf16.msra.mxu0 0
    %145 = vmatprep.subr.bf16.mxu0 0
    %146 = vmatpush1.bf16.msra.mxu0 0
    %147 = vmatprep.subr.bf16.mxu0 0
    %148 = vmatpush1.bf16.msra.mxu0 0
    %149 = vmatprep.subr.bf16.mxu0 0
    %150 = vmatpush1.bf16.msra.mxu0 0
    %151 = vmatprep.subr.bf16.mxu0 0
    %152 = vmatpush1.bf16.msra.mxu0 0
    %153 = vmatprep.subr.bf16.mxu0 0
    %154 = vmatpush1.bf16.msra.mxu0 0
    %155 = vmatprep.subr.bf16.mxu0 0
    %156 = vmatpush1.bf16.msra.mxu0 0
    %157 = vmatprep.mubr.bf16.mxu0 0
    %158 = vmatmul.mubr.bf16.gmra.mrb[0].mxu0 %v123
    %v159 = vpop.f32.mrb[0].mxu0
    %v160 = vadd.f32 0.0, %v159
    %v161 = vpop.f32.mrb[0].mxu0
    %v162 = vpop.f32.mrb[0].mxu0
    %v163 = vadd.f32 0.0, %v162
    %v164 = vpop.f32.mrb[0].mxu0
    %165 = vdwg.mxu0
    %166 = vxpose.xlu0.b32.start [1/16] %v160, 128
    %167 = vxpose.xlu0.b32.cont [2/16] 0.0, 128
    %168 = vxpose.xlu0.b32.cont [3/16] 0.0, 128
    %169 = vxpose.xlu0.b32.cont [4/16] 0.0, 128
    %170 = vxpose.xlu0.b32.cont [5/16] 0.0, 128
    %171 = vxpose.xlu0.b32.cont [6/16] 0.0, 128
    %172 = vxpose.xlu0.b32.cont [7/16] 0.0, 128
    %173 = vxpose.xlu0.b32.cont [8/16] 0.0, 128
    %174 = vxpose.xlu0.b32.cont [9/16] 0.0, 128
    %175 = vxpose.xlu0.b32.cont [10/16] 0.0, 128
    %176 = vxpose.xlu0.b32.cont [11/16] 0.0, 128
    %177 = vxpose.xlu0.b32.cont [12/16] 0.0, 128
    %178 = vxpose.xlu0.b32.cont [13/16] 0.0, 128
    %179 = vxpose.xlu0.b32.cont [14/16] 0.0, 128
    %180 = vxpose.xlu0.b32.cont [15/16] 0.0, 128
    %181 = vxpose.xlu0.b32.end [16/16] 0.0, 128
    %v182 = vpop.trf.xlu0
    %v183 = vpop.trf.xlu0
    %v184 = vpop.trf.xlu0
    %v185 = vpop.trf.xlu0
    %v186 = vpop.trf.xlu0
    %v187 = vpop.trf.xlu0
    %v188 = vpop.trf.xlu0
    %v189 = vpop.trf.xlu0
    %v190 = vpop.trf.xlu0
    %v191 = vpop.trf.xlu0
    %v192 = vpop.trf.xlu0
    %v193 = vpop.trf.xlu0
    %v194 = vpop.trf.xlu0
    %v195 = vpop.trf.xlu0
    %v196 = vpop.trf.xlu0
    %v197 = vpop.trf.xlu0
    %198 = vxpose.xlu0.b32.start [1/16] %v163, 128
    %199 = vxpose.xlu0.b32.cont [2/16] 0.0, 128
    %200 = vxpose.xlu0.b32.cont [3/16] 0.0, 128
    %201 = vxpose.xlu0.b32.cont [4/16] 0.0, 128
    %202 = vxpose.xlu0.b32.cont [5/16] 0.0, 128
    %203 = vxpose.xlu0.b32.cont [6/16] 0.0, 128
    %204 = vxpose.xlu0.b32.cont [7/16] 0.0, 128
    %205 = vxpose.xlu0.b32.cont [8/16] 0.0, 128
    %206 = vxpose.xlu0.b32.cont [9/16] 0.0, 128
    %207 = vxpose.xlu0.b32.cont [10/16] 0.0, 128
    %208 = vxpose.xlu0.b32.cont [11/16] 0.0, 128
    %209 = vxpose.xlu0.b32.cont [12/16] 0.0, 128
    %210 = vxpose.xlu0.b32.cont [13/16] 0.0, 128
    %211 = vxpose.xlu0.b32.cont [14/16] 0.0, 128
    %212 = vxpose.xlu0.b32.cont [15/16] 0.0, 128
    %213 = vxpose.xlu0.b32.end [16/16] 0.0, 128
    %v214 = vpop.trf.xlu0
    %v215 = vpop.trf.xlu0
    %v216 = vpop.trf.xlu0
    %v217 = vpop.trf.xlu0
    %v218 = vpop.trf.xlu0
    %v219 = vpop.trf.xlu0
    %v220 = vpop.trf.xlu0
    %v221 = vpop.trf.xlu0
    %v222 = vpop.trf.xlu0
    %v223 = vpop.trf.xlu0
    %v224 = vpop.trf.xlu0
    %v225 = vpop.trf.xlu0
    %v226 = vpop.trf.xlu0
    %v227 = vpop.trf.xlu0
    %v228 = vpop.trf.xlu0
    %v229 = vpop.trf.xlu0
    %v230 = vld [vmem:[%s1] sm:$0x3]
    %v233 = vunpack.c.l.s4 1966171168
    %v234 = vunpack.c.0.s8 %v233
    %v235 = vlaneseq
    %v236 = vshrl.u32 %v235, 7
    %v237 = vsub.s32 %v234, %v236
    %v238 = vrot.slane %v230, %v237
    %v239 = vcombine.high %v238, %v238
    %v241 = vunpack.c.l.s4 1966171168
    %v242 = vunpack.c.0.s8 %v241
    %v243 = vlaneseq
    %v244 = vshrl.u32 %v243, 7
    %v245 = vsub.s32 %v242, %v244
    %v246 = vrot.slane %v238, %v245
    %v248 = vunpack.c.l.s4 1966171168
    %v249 = vunpack.c.0.s8 %v248
    %v250 = vlaneseq
    %v251 = vshrl.u32 %v250, 7
    %v252 = vsub.s32 %v249, %v251
    %v253 = vrot.slane %v239, %v252
    %v254 = vlaneseq
    %v255 = vshrl.u32 %v254, 7
    %v256 = vsub.s32 0, %v255
    %v257 = vrot.slane %v246, %v256
    %v258 = vlaneseq
    %v259 = vshrl.u32 %v258, 7
    %v260 = vsub.s32 0, %v259
    %v261 = vrot.slane %v253, %v260
    %v264 = vadd.f32 %v182, %v257
    %v265 = vadd.f32 %v183, %v257
    %v266 = vadd.f32 %v214, %v261
    %v267 = vadd.f32 %v215, %v261
    %vm268 = vcmask 64512
    %v269 = vsel %vm268, %v264, -inf
    %270 = vmax.xlane.f32.xlu0 %v269
    %v271 = vpop.xlane.xlu0 %270
    %v272 = vsel %vm268, %v265, -inf
    %273 = vmax.xlane.f32.xlu0 %v272
    %v274 = vpop.xlane.xlu0 %273
    %v275 = vsel %vm268, %v266, -inf
    %276 = vmax.xlane.f32.xlu0 %v275
    %v277 = vpop.xlane.xlu0 %276
    %v278 = vsel %vm268, %v267, -inf
    %279 = vmax.xlane.f32.xlu0 %v278
    %v280 = vpop.xlane.xlu0 %279
    %v281 = vsub.f32 %v264, %v271
    %v282 = vsub.f32 %v265, %v274
    %v283 = vsub.f32 %v266, %v277
    %v284 = vsub.f32 %v267, %v280
    %v285 = vmul.f32 %v281, 1.442695
    %v286 = vpow.pop %v285
    %v287 = vmul.f32 %v282, 1.442695
    %v288 = vpow.pop %v287
    %v289 = vmul.f32 %v283, 1.442695
    %v290 = vpow.pop %v289
    %v291 = vmul.f32 %v284, 1.442695
    %v292 = vpow.pop %v291
    %v293 = vsel %vm268, %v286, 0.0
    %294 = vadd.xlane.f32.xlu0 %v293
    %v295 = vpop.xlane.xlu0 %294
    %v296 = vsel %vm268, %v288, 0.0
    %297 = vadd.xlane.f32.xlu0 %v296
    %v298 = vpop.xlane.xlu0 %297
    %v299 = vsel %vm268, %v290, 0.0
    %300 = vadd.xlane.f32.xlu0 %v299
    %v301 = vpop.xlane.xlu0 %300
    %v302 = vsel %vm268, %v292, 0.0
    %303 = vadd.xlane.f32.xlu0 %v302
    %v304 = vpop.xlane.xlu0 %303
    %v305 = vrcp.pop %v295
    %v306 = vrcp.pop %v298
    %v307 = vrcp.pop %v301
    %v308 = vrcp.pop %v304
    %v309 = vmul.f32 %v286, %v305
    %v310 = vmul.f32 %v288, %v306
    %v311 = vmul.f32 %v290, %v307
    %v312 = vmul.f32 %v292, %v308
    %v313 = vpack.c.bf16 %v310, %v309
    %v314 = vpack.c.bf16 %v312, %v311
    %v316 = vsel %vm268, %v313, 0
    %vm318 = vcmask 1043456
    %v320 = vsel %vm318, %v19, 0
    %322 = vmatprep.subr.bf16.mxu0 0
    %323 = vmatpush1.bf16.msra.mxu0 %v320
    %324 = vmatprep.subr.bf16.mxu0 0
    %325 = vmatpush1.bf16.msra.mxu0 0
    %326 = vmatprep.subr.bf16.mxu0 0
    %327 = vmatpush1.bf16.msra.mxu0 0
    %328 = vmatprep.subr.bf16.mxu0 0
    %329 = vmatpush1.bf16.msra.mxu0 0
    %330 = vmatprep.subr.bf16.mxu0 0
    %331 = vmatpush1.bf16.msra.mxu0 0
    %332 = vmatprep.subr.bf16.mxu0 0
    %333 = vmatpush1.bf16.msra.mxu0 0
    %334 = vmatprep.subr.bf16.mxu0 0
    %335 = vmatpush1.bf16.msra.mxu0 0
    %336 = vmatprep.subr.bf16.mxu0 0
    %337 = vmatpush1.bf16.msra.mxu0 0
    %338 = vmatprep.subr.bf16.mxu0 0
    %339 = vmatpush1.bf16.msra.mxu0 0
    %340 = vmatprep.subr.bf16.mxu0 0
    %341 = vmatpush1.bf16.msra.mxu0 0
    %342 = vmatprep.subr.bf16.mxu0 0
    %343 = vmatpush1.bf16.msra.mxu0 0
    %344 = vmatprep.subr.bf16.mxu0 0
    %345 = vmatpush1.bf16.msra.mxu0 0
    %346 = vmatprep.subr.bf16.mxu0 0
    %347 = vmatpush1.bf16.msra.mxu0 0
    %348 = vmatprep.subr.bf16.mxu0 0
    %349 = vmatpush1.bf16.msra.mxu0 0
    %350 = vmatprep.subr.bf16.mxu0 0
    %351 = vmatpush1.bf16.msra.mxu0 0
    %352 = vmatprep.subr.bf16.mxu0 0
    %353 = vmatpush1.bf16.msra.mxu0 0
    %354 = vmatprep.mubr.bf16.mxu0 0
    %355 = vmatmul.mubr.bf16.gmra.mrb[0].mxu0 %v316
    %v356 = vpop.f32.mrb[0].mxu0
    %v357 = vadd.f32 0.0, %v356
    %v358 = vpop.f32.mrb[0].mxu0
    %v359 = vpop.f32.mrb[0].mxu0
    %v360 = vadd.f32 0.0, %v359
    %v361 = vpop.f32.mrb[0].mxu0
    %362 = vdwg.mxu0
    %v364 = vsel %vm268, %v314, 0
    %v367 = vsel %vm318, %v20, 0
    %369 = vmatprep.subr.bf16.mxu0 0
    %370 = vmatpush1.bf16.msra.mxu0 %v367
    %371 = vmatprep.subr.bf16.mxu0 0
    %372 = vmatpush1.bf16.msra.mxu0 0
    %373 = vmatprep.subr.bf16.mxu0 0
    %374 = vmatpush1.bf16.msra.mxu0 0
    %375 = vmatprep.subr.bf16.mxu0 0
    %376 = vmatpush1.bf16.msra.mxu0 0
    %377 = vmatprep.subr.bf16.mxu0 0
    %378 = vmatpush1.bf16.msra.mxu0 0
    %379 = vmatprep.subr.bf16.mxu0 0
    %380 = vmatpush1.bf16.msra.mxu0 0
    %381 = vmatprep.subr.bf16.mxu0 0
    %382 = vmatpush1.bf16.msra.mxu0 0
    %383 = vmatprep.subr.bf16.mxu0 0
    %384 = vmatpush1.bf16.msra.mxu0 0
    %385 = vmatprep.subr.bf16.mxu0 0
    %386 = vmatpush1.bf16.msra.mxu0 0
    %387 = vmatprep.subr.bf16.mxu0 0
    %388 = vmatpush1.bf16.msra.mxu0 0
    %389 = vmatprep.subr.bf16.mxu0 0
    %390 = vmatpush1.bf16.msra.mxu0 0
    %391 = vmatprep.subr.bf16.mxu0 0
    %392 = vmatpush1.bf16.msra.mxu0 0
    %393 = vmatprep.subr.bf16.mxu0 0
    %394 = vmatpush1.bf16.msra.mxu0 0
    %395 = vmatprep.subr.bf16.mxu0 0
    %396 = vmatpush1.bf16.msra.mxu0 0
    %397 = vmatprep.subr.bf16.mxu0 0
    %398 = vmatpush1.bf16.msra.mxu0 0
    %399 = vmatprep.subr.bf16.mxu0 0
    %400 = vmatpush1.bf16.msra.mxu0 0
    %401 = vmatprep.mubr.bf16.mxu0 0
    %402 = vmatmul.mubr.bf16.gmra.mrb[0].mxu0 %v364
    %v403 = vpop.f32.mrb[0].mxu0
    %v404 = vadd.f32 0.0, %v403
    %v405 = vpop.f32.mrb[0].mxu0
    %v406 = vpop.f32.mrb[0].mxu0
    %v407 = vadd.f32 0.0, %v406
    %v408 = vpop.f32.mrb[0].mxu0
    %409 = vdwg.mxu0
    %v410 = vsel %vm42, %v357, -inf
    %v411 = vsel %vm42, %v360, -inf
    %v412 = vmax.f32 %v410, %v411
    %v413 = vrot.slane %v412, 4
    %v414 = vmax.f32 %v412, %v413
    %v415 = vrot.slane %v414, 2
    %v416 = vmax.f32 %v414, %v415
    %v417 = vrot.slane %v416, 1
    %v418 = vmax.f32 %v416, %v417
    %v419 = vsel %vm42, %v404, -inf
    %v420 = vsel %vm42, %v407, -inf
    %v421 = vmax.f32 %v419, %v420
    %v422 = vrot.slane %v421, 4
    %v423 = vmax.f32 %v421, %v422
    %v424 = vrot.slane %v423, 2
    %v425 = vmax.f32 %v423, %v424
    %v426 = vrot.slane %v425, 1
    %v427 = vmax.f32 %v425, %v426
    %vm430 = vcmask 1041409
    %v431 = vsel %vm430, %v427, %v418
    %vm433 = vcmask 254976
    %434 = vst.msk [vmem:[#allocation2] sm:$0x3] %vm433, %v431
    %v435 = vsel %vm42, %v357, 0.0
    %v436 = vsel %vm42, %v360, 0.0
    %v437 = vadd.f32 %v435, %v436
    %v438 = vrot.slane %v437, 4
    %v439 = vadd.f32 %v437, %v438
    %v440 = vrot.slane %v439, 2
    %v441 = vadd.f32 %v439, %v440
    %v442 = vrot.slane %v441, 1
    %v443 = vadd.f32 %v441, %v442
    %v444 = vsel %vm42, %v404, 0.0
    %v445 = vsel %vm42, %v407, 0.0
    %v446 = vadd.f32 %v444, %v445
    %v447 = vrot.slane %v446, 4
    %v448 = vadd.f32 %v446, %v447
    %v449 = vrot.slane %v448, 2
    %v450 = vadd.f32 %v448, %v449
    %v451 = vrot.slane %v450, 1
    %v452 = vadd.f32 %v450, %v451
    %v453 = vmul.f32 %v443, 0.0625
    %v454 = vmul.f32 %v452, 0.0625
    %v457 = vsel %vm430, %v454, %v453
    %458 = vrot.lane.b32.xlu0 %v457, 32
    %v459 = vpop.permute.xlu0 %458
    %vm461 = vcmask 517376
    %462 = vst.msk [vmem:[#allocation2] sm:$0x3] %vm461, %v459
    // Predicated region
    $region18: #{tpu_custom_call.1} parent=1 // pred_check
      _
    $region19: #{tpu_custom_call.1} parent=1 // pred_check_branch
      %464 = sbr.rel (0) target = $region21
    $region20: #{tpu_custom_call.1} parent=1 // pred_region
      %s466 = ssub.s32 32, 32
      %467 = vsyncadd [#allocation3], %s466
      %s469 = sshll.u32 [#allocation2], 4
      %s470 = int_to_ptr.vmem [resolvable:$true] %s469
      %472 = dma.vmem_to_hbm [thread:$0]  %s470, 32, %s4, [#allocation3]
    $region21: #{tpu_custom_call.1} parent=1 // pred_fallthru
      _
    // Predicated region
    $region22: #{tpu_custom_call.1} parent=1 // pred_check
      _
    $region23: #{tpu_custom_call.1} parent=1 // pred_check_branch
      %474 = sbr.rel (0) target = $region25
    $region24: #{tpu_custom_call.1} parent=1 // pred_region
      %475 = dma.done [#allocation3], 32
    $region25: #{tpu_custom_call.1} parent=1 // pred_fallthru
      _
    %476 = vsyncpa [#allocation3], 1

</llo_original>
